<compile_context>
chip_gen: v7x
topology: tpu7x:2x2x1
jax: 0.10.0
libtpu: 0.0.40
codegen_flags: <defaults>
</compile_context>

<pallas_src>
import jax
import jax.numpy as jnp
from jax.experimental import pallas as pl
from jax.experimental.pallas import tpu as pltpu


def _round_up(x, m):
    return ((x + m - 1) // m) * m


def _prefix_mlp_kernel(x_ref, w0_ref, b0_ref, w1_ref, b1_ref, o_ref, h_ref):
    """Grid = (row tiles i, D_out column tiles j); j innermost ("arbitrary")."""
    # dense0 + tanh: once per row tile (at j == 0) into the VMEM scratch,
    # reused for every column tile of dense1.
    @pl.when(pl.program_id(1) == 0)
    def _():
        x = x_ref[...].astype(w0_ref.dtype)                       # bf16 operand
        h = jnp.dot(x, w0_ref[...], preferred_element_type=jnp.float32)
        h = jnp.tanh(h + b0_ref[...].astype(jnp.float32))         # tanh -> EUP
        h_ref[...] = h.astype(h_ref.dtype)

    # dense1 on one (D_mid, TN) column slab of w1 (f32 accumulation on MXU).
    # NOTE: for very large D_mid (>~8K) this contraction could be chunked over
    # D_mid with a fori_loop + f32 accumulator to bound VMEM/vreg live ranges.
    y = jnp.dot(h_ref[...], w1_ref[...], preferred_element_type=jnp.float32)
    y = y + b1_ref[...].astype(jnp.float32)
    o_ref[...] = y.astype(o_ref.dtype)


def _make_call(*, N, D_in, D_mid, D_out, TM, TN, out_dtype, h_dtype,
               vmem_limit_bytes, single_buffer_consts):
    # w0 / b0 have constant index maps -> single-buffer them when supported.
    if single_buffer_consts and hasattr(pl, "Buffered"):
        const_kw = {"pipeline_mode": pl.Buffered(1)}
    else:
        const_kw = {}

    in_specs = [
        pl.BlockSpec((TM, D_in), lambda i, j: (i, 0)),                  # x row tile
        pl.BlockSpec((D_in, D_mid), lambda i, j: (0, 0), **const_kw),   # w0 resident
        pl.BlockSpec((1, D_mid), lambda i, j: (0, 0), **const_kw),      # b0 resident
        pl.BlockSpec((D_mid, TN), lambda i, j: (0, j)),                 # w1 col slab
        pl.BlockSpec((1, TN), lambda i, j: (0, j)),                     # b1 col slab
    ]
    out_specs = pl.BlockSpec((TM, TN), lambda i, j: (i, j))

    return pl.pallas_call(
        _prefix_mlp_kernel,
        out_shape=jax.ShapeDtypeStruct((N, D_out), out_dtype),
        grid=(pl.cdiv(N, TM), pl.cdiv(D_out, TN)),
        in_specs=in_specs,
        out_specs=out_specs,
        scratch_shapes=[pltpu.VMEM((TM, D_mid), h_dtype)],              # h scratch
        compiler_params=pltpu.CompilerParams(
            # rows: parallel (v7x dual-TC); cols: arbitrary (h scratch reuse).
            dimension_semantics=("parallel", "arbitrary"),
            vmem_limit_bytes=vmem_limit_bytes,
        ),
    )


def prefix_mlp_forward(hidden_states, params, *, tm=256, tn=512,
                       out_dtype=None, vmem_limit_bytes=48 * 1024 * 1024):
    """hidden_states: (..., feature_size) -> (..., hidden_size * prefix_len)."""
    w0 = params["w0"]                                    # (D_in,  D_mid) == dense0.weight.T
    w1 = params["w1"]                                    # (D_mid, D_out) == dense1.weight.T
    b0 = params["b0"].reshape(1, -1).astype(jnp.float32)  # (1, D_mid)
    b1 = params["b1"].reshape(1, -1).astype(jnp.float32)  # (1, D_out)

    D_in, D_mid = w0.shape
    D_out = w1.shape[1]
    lead = hidden_states.shape[:-1]

    x = hidden_states.reshape(-1, D_in)                  # reshape only: no cast, no pad
    N = x.shape[0]
    if out_dtype is None:
        out_dtype = hidden_states.dtype

    # Row tile: multiple of 8 (sublane), capped at `tm`.
    TM = min(_round_up(max(N, 1), 8), _round_up(tm, 8))
    # Column tile: full D_out if it fits, otherwise a multiple of 128 (lane-dense).
    if D_out <= tn:
        TN = D_out
    else:
        TN = max(128, (tn // 128) * 128)

    kwargs = dict(N=N, D_in=D_in, D_mid=D_mid, D_out=D_out, TM=TM, TN=TN,
                  out_dtype=out_dtype, h_dtype=w0.dtype,
                  vmem_limit_bytes=vmem_limit_bytes)
    try:
        out = _make_call(single_buffer_consts=True, **kwargs)(x, w0, b0, w1, b1)
    except Exception:
        # Fallback if this JAX build rejects pipeline_mode on the top-level grid.
        out = _make_call(single_buffer_consts=False, **kwargs)(x, w0, b0, w1, b1)

    return out.reshape(*lead, D_out)


def init_params(key, feature_size, hidden_size, prefix_len,
                weight_dtype=jnp.bfloat16):
    """nn.Linear default init; weights stored transposed as (in, out) in bf16,
    biases in f32 (added after f32 accumulation)."""
    d_mid = hidden_size * prefix_len // 2
    d_out = hidden_size * prefix_len
    ks = jax.random.split(key, 4)

    def unif(k, shape, fan_in):
        bound = 1.0 / jnp.sqrt(fan_in)
        return jax.random.uniform(k, shape, jnp.float32, -bound, bound)

    return {
        "w0": unif(ks[0], (feature_size, d_mid), feature_size).astype(weight_dtype),
        "b0": unif(ks[1], (d_mid,), feature_size),
        "w1": unif(ks[2], (d_mid, d_out), d_mid).astype(weight_dtype),
        "b1": unif(ks[3], (d_out,), d_mid),
    }


if __name__ == "__main__":
    key = jax.random.PRNGKey(0)
    k_param, k_x = jax.random.split(key)

    # Small shapes consistent with the module.
    batch = 2
    feature_size = 32
    hidden_size = 32
    prefix_len = 8                 # D_mid = 32*8//2 = 128, D_out = 32*8 = 256
    hidden_dropout_prob = 0.1      # accepted by the torch ctor, unused in forward

    params = init_params(k_param, feature_size, hidden_size, prefix_len)
    hidden_states = jax.random.normal(k_x, (batch, feature_size), jnp.float32)

    out = prefix_mlp_forward(hidden_states, params)
    out = jax.block_until_ready(out)

    # Pure-JAX reference with the same precision strategy (bf16 operands,
    # f32 accumulation) as the kernel.
    xb = hidden_states.astype(params["w0"].dtype)
    h = jnp.tanh(jnp.dot(xb, params["w0"], preferred_element_type=jnp.float32)
                 + params["b0"].astype(jnp.float32))
    ref = (jnp.dot(h.astype(params["w1"].dtype), params["w1"],
                   preferred_element_type=jnp.float32)
           + params["b1"].astype(jnp.float32))

    assert out.shape == (batch, hidden_size * prefix_len), out.shape
    assert out.dtype == hidden_states.dtype
    max_err = float(jnp.max(jnp.abs(out.astype(jnp.float32) - ref)))
    assert jnp.allclose(out.astype(jnp.float32), ref, atol=2e-2, rtol=2e-2), max_err

    print("KERNEL_OK")
</pallas_src>

<mosaic_0001>
module attributes {stable_mosaic.version = 11 : i64} {
  func.func @_prefix_mlp_kernel(%arg0: i32, %arg1: i32, %arg2: memref<8x32xf32, #tpu.memory_space<vmem>>, %arg3: memref<32x128xbf16, #tpu.memory_space<vmem>>, %arg4: memref<1x128xf32, #tpu.memory_space<vmem>>, %arg5: memref<128x256xbf16, #tpu.memory_space<vmem>>, %arg6: memref<1x256xf32, #tpu.memory_space<vmem>>, %arg7: memref<8x256xf32, #tpu.memory_space<vmem>>, %arg8: memref<8x128xbf16, #tpu.memory_space<vmem>>) attributes {dimension_semantics = [#tpu.dimension_semantics<parallel>, #tpu.dimension_semantics<arbitrary>], iteration_bounds = array<i64: 1, 1>, scalar_prefetch = 0 : i64, scratch_operands = 1 : i64, tpu.core_type = #tpu.core_type<tc>, window_params = [{transform_indices = @transform_0, window_bounds = array<i64: 8, 32>}, {pipeline_mode = #tpu.pipeline_mode<synchronous>, transform_indices = @transform_1, window_bounds = array<i64: 32, 128>}, {pipeline_mode = #tpu.pipeline_mode<synchronous>, transform_indices = @transform_2, window_bounds = array<i64: 1, 128>}, {transform_indices = @transform_3, window_bounds = array<i64: 128, 256>}, {transform_indices = @transform_4, window_bounds = array<i64: 1, 256>}, {transform_indices = @transform_5, window_bounds = array<i64: 8, 256>}]} {
    %c0_i32 = arith.constant 0 : i32
    %0 = arith.cmpi eq, %arg1, %c0_i32 : i32
    %1 = arith.extui %0 : i1 to i32
    %c0_i32_0 = arith.constant 0 : i32
    %2 = arith.cmpi ne, %1, %c0_i32_0 : i32
    scf.if %2 {
      %c0_8 = arith.constant 0 : index
      %c0_9 = arith.constant 0 : index
      %10 = vector.load %arg2[%c0_8, %c0_9] : memref<8x32xf32, #tpu.memory_space<vmem>>, vector<8x32xf32>
      %11 = arith.truncf %10 : vector<8x32xf32> to vector<8x32xbf16>
      %c0_10 = arith.constant 0 : index
      %c0_11 = arith.constant 0 : index
      %12 = vector.load %arg3[%c0_10, %c0_11] : memref<32x128xbf16, #tpu.memory_space<vmem>>, vector<32x128xbf16>
      %cst_12 = arith.constant dense<0.000000e+00> : vector<8x128xf32>
      %13 = tpu.matmul %11, %12, %cst_12 {dimension_numbers = #tpu.dot_dimension_numbers<[1], [0], [0], [1], [0, 0, 1, 1], [], []>} : vector<8x32xbf16>, vector<32x128xbf16>, vector<8x128xf32> -> vector<8x128xf32>
      %c0_13 = arith.constant 0 : index
      %c0_14 = arith.constant 0 : index
      %14 = vector.load %arg4[%c0_13, %c0_14] : memref<1x128xf32, #tpu.memory_space<vmem>>, vector<1x128xf32>
      %15 = vector.broadcast %14 : vector<1x128xf32> to vector<8x128xf32>
      %16 = arith.addf %13, %15 : vector<8x128xf32>
      %17 = math.tanh %16 : vector<8x128xf32>
      %18 = arith.truncf %17 : vector<8x128xf32> to vector<8x128xbf16>
      %c0_15 = arith.constant 0 : index
      %c0_16 = arith.constant 0 : index
      %19 = vector.load %arg8[%c0_15, %c0_16] : memref<8x128xbf16, #tpu.memory_space<vmem>>, vector<8x128xbf16>
      tpu.vector_store %arg8[%c0_15, %c0_16], %18 {strides = array<i32>} : memref<8x128xbf16, #tpu.memory_space<vmem>>, vector<8x128xbf16>,
    } else {
    }
    %c0 = arith.constant 0 : index
    %c0_1 = arith.constant 0 : index
    %3 = vector.load %arg8[%c0, %c0_1] : memref<8x128xbf16, #tpu.memory_space<vmem>>, vector<8x128xbf16>
    %c0_2 = arith.constant 0 : index
    %c0_3 = arith.constant 0 : index
    %4 = vector.load %arg5[%c0_2, %c0_3] : memref<128x256xbf16, #tpu.memory_space<vmem>>, vector<128x256xbf16>
    %cst = arith.constant dense<0.000000e+00> : vector<8x256xf32>
    %5 = tpu.matmul %3, %4, %cst {dimension_numbers = #tpu.dot_dimension_numbers<[1], [0], [0], [1], [0, 0, 1, 1], [], []>} : vector<8x128xbf16>, vector<128x256xbf16>, vector<8x256xf32> -> vector<8x256xf32>
    %c0_4 = arith.constant 0 : index
    %c0_5 = arith.constant 0 : index
    %6 = vector.load %arg6[%c0_4, %c0_5] : memref<1x256xf32, #tpu.memory_space<vmem>>, vector<1x256xf32>
    %7 = vector.broadcast %6 : vector<1x256xf32> to vector<8x256xf32>
    %8 = arith.addf %5, %7 : vector<8x256xf32>
    %c0_6 = arith.constant 0 : index
    %c0_7 = arith.constant 0 : index
    %9 = vector.load %arg7[%c0_6, %c0_7] : memref<8x256xf32, #tpu.memory_space<vmem>>, vector<8x256xf32>
    tpu.vector_store %arg7[%c0_6, %c0_7], %8 {strides = array<i32>} : memref<8x256xf32, #tpu.memory_space<vmem>>, vector<8x256xf32>,
    return
  }
  func.func @transform_0(%arg0: i32, %arg1: i32) -> (i32, i32) {
    %c0_i32 = arith.constant 0 : i32
    %c0_i32_0 = arith.constant 0 : i32
    return %arg0, %c0_i32 : i32, i32
  }
  func.func @transform_1(%arg0: i32, %arg1: i32) -> (i32, i32) {
    %c0_i32 = arith.constant 0 : i32
    %c0_i32_0 = arith.constant 0 : i32
    %c0_i32_1 = arith.constant 0 : i32
    return %c0_i32, %c0_i32_0 : i32, i32
  }
  func.func @transform_2(%arg0: i32, %arg1: i32) -> (i32, i32) {
    %c0_i32 = arith.constant 0 : i32
    %c0_i32_0 = arith.constant 0 : i32
    %c0_i32_1 = arith.constant 0 : i32
    return %c0_i32, %c0_i32_0 : i32, i32
  }
  func.func @transform_3(%arg0: i32, %arg1: i32) -> (i32, i32) {
    %c0_i32 = arith.constant 0 : i32
    %c0_i32_0 = arith.constant 0 : i32
    return %c0_i32, %arg1 : i32, i32
  }
  func.func @transform_4(%arg0: i32, %arg1: i32) -> (i32, i32) {
    %c0_i32 = arith.constant 0 : i32
    %c0_i32_0 = arith.constant 0 : i32
    return %c0_i32, %arg1 : i32, i32
  }
  func.func @transform_5(%arg0: i32, %arg1: i32) -> (i32, i32) {
    %c0_i32 = arith.constant 0 : i32
    return %arg0, %arg1 : i32, i32
  }
}

module attributes {stable_mosaic.version = 11 : i64} {
  func.func @_prefix_mlp_kernel(%arg0: i32, %arg1: i32, %arg2: memref<8x32xf32, #tpu.memory_space<vmem>>, %arg3: memref<32x128xbf16, #tpu.memory_space<vmem>>, %arg4: memref<1x128xf32, #tpu.memory_space<vmem>>, %arg5: memref<128x256xbf16, #tpu.memory_space<vmem>>, %arg6: memref<1x256xf32, #tpu.memory_space<vmem>>, %arg7: memref<8x256xf32, #tpu.memory_space<vmem>>, %arg8: memref<8x128xbf16, #tpu.memory_space<vmem>>) attributes {dimension_semantics = [#tpu.dimension_semantics<parallel>, #tpu.dimension_semantics<arbitrary>], iteration_bounds = array<i64: 1, 1>, scalar_prefetch = 0 : i64, scratch_operands = 1 : i64, tpu.core_type = #tpu.core_type<tc>, window_params = [{transform_indices = @transform_0, window_bounds = array<i64: 8, 32>}, {pipeline_mode = #tpu.pipeline_mode<synchronous>, transform_indices = @transform_1, window_bounds = array<i64: 32, 128>}, {pipeline_mode = #tpu.pipeline_mode<synchronous>, transform_indices = @transform_2, window_bounds = array<i64: 1, 128>}, {transform_indices = @transform_3, window_bounds = array<i64: 128, 256>}, {transform_indices = @transform_4, window_bounds = array<i64: 1, 256>}, {transform_indices = @transform_5, window_bounds = array<i64: 8, 256>}]} {
    %c0_i32 = arith.constant 0 : i32
    %0 = arith.cmpi eq, %arg1, %c0_i32 : i32
    %1 = arith.extui %0 : i1 to i32
    %c0_i32_0 = arith.constant 0 : i32
    %2 = arith.cmpi ne, %1, %c0_i32_0 : i32
    scf.if %2 {
      %c0_8 = arith.constant 0 : index
      %c0_9 = arith.constant 0 : index
      %10 = vector.load %arg2[%c0_8, %c0_9] : memref<8x32xf32, #tpu.memory_space<vmem>>, vector<8x32xf32>
      %11 = arith.truncf %10 : vector<8x32xf32> to vector<8x32xbf16>
      %c0_10 = arith.constant 0 : index
      %c0_11 = arith.constant 0 : index
      %12 = vector.load %arg3[%c0_10, %c0_11] : memref<32x128xbf16, #tpu.memory_space<vmem>>, vector<32x128xbf16>
      %cst_12 = arith.constant dense<0.000000e+00> : vector<8x128xf32>
      %13 = tpu.matmul %11, %12, %cst_12 {dimension_numbers = #tpu.dot_dimension_numbers<[1], [0], [0], [1], [0, 0, 1, 1], [], []>} : vector<8x32xbf16>, vector<32x128xbf16>, vector<8x128xf32> -> vector<8x128xf32>
      %c0_13 = arith.constant 0 : index
      %c0_14 = arith.constant 0 : index
      %14 = vector.load %arg4[%c0_13, %c0_14] : memref<1x128xf32, #tpu.memory_space<vmem>>, vector<1x128xf32>
      %15 = vector.broadcast %14 : vector<1x128xf32> to vector<8x128xf32>
      %16 = arith.addf %13, %15 : vector<8x128xf32>
      %17 = math.tanh %16 : vector<8x128xf32>
      %18 = arith.truncf %17 : vector<8x128xf32> to vector<8x128xbf16>
      %c0_15 = arith.constant 0 : index
      %c0_16 = arith.constant 0 : index
      %19 = vector.load %arg8[%c0_15, %c0_16] : memref<8x128xbf16, #tpu.memory_space<vmem>>, vector<8x128xbf16>
      tpu.vector_store %arg8[%c0_15, %c0_16], %18 {strides = array<i32>} : memref<8x128xbf16, #tpu.memory_space<vmem>>, vector<8x128xbf16>,
    } else {
    }
    %c0 = arith.constant 0 : index
    %c0_1 = arith.constant 0 : index
    %3 = vector.load %arg8[%c0, %c0_1] : memref<8x128xbf16, #tpu.memory_space<vmem>>, vector<8x128xbf16>
    %c0_2 = arith.constant 0 : index
    %c0_3 = arith.constant 0 : index
    %4 = vector.load %arg5[%c0_2, %c0_3] : memref<128x256xbf16, #tpu.memory_space<vmem>>, vector<128x256xbf16>
    %cst = arith.constant dense<0.000000e+00> : vector<8x256xf32>
    %5 = tpu.matmul %3, %4, %cst {dimension_numbers = #tpu.dot_dimension_numbers<[1], [0], [0], [1], [0, 0, 1, 1], [], []>} : vector<8x128xbf16>, vector<128x256xbf16>, vector<8x256xf32> -> vector<8x256xf32>
    %c0_4 = arith.constant 0 : index
    %c0_5 = arith.constant 0 : index
    %6 = vector.load %arg6[%c0_4, %c0_5] : memref<1x256xf32, #tpu.memory_space<vmem>>, vector<1x256xf32>
    %7 = vector.broadcast %6 : vector<1x256xf32> to vector<8x256xf32>
    %8 = arith.addf %5, %7 : vector<8x256xf32>
    %c0_6 = arith.constant 0 : index
    %c0_7 = arith.constant 0 : index
    %9 = vector.load %arg7[%c0_6, %c0_7] : memref<8x256xf32, #tpu.memory_space<vmem>>, vector<8x256xf32>
    tpu.vector_store %arg7[%c0_6, %c0_7], %8 {strides = array<i32>} : memref<8x256xf32, #tpu.memory_space<vmem>>, vector<8x256xf32>,
    return
  }
  func.func @transform_0(%arg0: i32, %arg1: i32) -> (i32, i32) {
    %c0_i32 = arith.constant 0 : i32
    %c0_i32_0 = arith.constant 0 : i32
    return %arg0, %c0_i32 : i32, i32
  }
  func.func @transform_1(%arg0: i32, %arg1: i32) -> (i32, i32) {
    %c0_i32 = arith.constant 0 : i32
    %c0_i32_0 = arith.constant 0 : i32
    %c0_i32_1 = arith.constant 0 : i32
    return %c0_i32, %c0_i32_0 : i32, i32
  }
  func.func @transform_2(%arg0: i32, %arg1: i32) -> (i32, i32) {
    %c0_i32 = arith.constant 0 : i32
    %c0_i32_0 = arith.constant 0 : i32
    %c0_i32_1 = arith.constant 0 : i32
    return %c0_i32, %c0_i32_0 : i32, i32
  }
  func.func @transform_3(%arg0: i32, %arg1: i32) -> (i32, i32) {
    %c0_i32 = arith.constant 0 : i32
    %c0_i32_0 = arith.constant 0 : i32
    return %c0_i32, %arg1 : i32, i32
  }
  func.func @transform_4(%arg0: i32, %arg1: i32) -> (i32, i32) {
    %c0_i32 = arith.constant 0 : i32
    %c0_i32_0 = arith.constant 0 : i32
    return %c0_i32, %arg1 : i32, i32
  }
  func.func @transform_5(%arg0: i32, %arg1: i32) -> (i32, i32) {
    %c0_i32 = arith.constant 0 : i32
    return %arg0, %arg1 : i32, i32
  }
}

</mosaic_0001>

<llo_original>
// kernel: tpu_custom_call.1
$region0: #{tpu_custom_call.1}
  #allocation0 [shape = 'u32[]', space=smem, size = 0x4, offset = 0x4, fixed_abs, tag = 'smem constant byte address 0x4 - core index']
  #allocation1 [shape = 'u32[144,128]{1,0:T(1,128)}', space=vmem, size = 0x12000, scoped, tag = 'internal scratch']
  #allocation2 [shape = 'bf16[8,128]{1,0:T(8,128)(2,1)}', space=vmem, size = 0x800, scoped, tag = 'scratch operand']
  %s0 = inlined_call_operand.hbm [shape: f32[2,32], index: 0, kind: input, shape index: {}]
  %s1 = inlined_call_operand.hbm [shape: bf16[32,128], index: 1, kind: input, shape index: {}]
  %s2 = inlined_call_operand.vmem [shape: f32[1,128], index: 2, kind: input, shape index: {}]
  %s3 = inlined_call_operand.hbm [shape: bf16[128,256], index: 3, kind: input, shape index: {}]
  %s4 = inlined_call_operand.vmem [shape: f32[1,256], index: 4, kind: input, shape index: {}]
  %s5 = inlined_call_operand.hbm [shape: f32[2,256], index: 5, kind: output, shape index: {}]
  %s6 = sld [smem:[#allocation0]]
  $region46: #{tpu_custom_call.1} parent=0
    _
  %s8 = ssub.s32 1, %s6
  %s9 = scalar_select 0, %s8, %s6
  $region1: #{tpu_custom_call.1} parent=0
    #allocation3 [shape = 'u8[4096]{0}', space=vmem, size = 0x1000, scoped, tag = 'input window, operand 0, single buffered']
    #allocation4 [shape = 's32[1]{0}', space=sflag, size = 0x4, scoped, tag = 'scoped memory for tpu_custom_call.1']
    #allocation5 [shape = 's32[1]{0}', space=sflag, size = 0x4, scoped, tag = 'scoped memory for tpu_custom_call.1']
    #allocation6 [shape = 'u8[8192]{0}', space=vmem, size = 0x2000, scoped, tag = 'input window, operand 1, single buffered']
    #allocation7 [shape = 's32[1]{0}', space=sflag, size = 0x4, scoped, tag = 'scoped memory for tpu_custom_call.1']
    #allocation8 [shape = 'u8[65536]{0}', space=vmem, size = 0x10000, scoped, tag = 'input window, operand 3, single buffered']
    #allocation9 [shape = 'u8[8192]{0}', space=vmem, size = 0x2000, scoped, tag = 'output window, operand 0, single buffered']
    %10 = vsyncpa [#allocation4], 0
    %11 = vsyncpa [#allocation7], 0
    %12 = vsyncpa [#allocation5], 0
    // Predicated region
    $region2: #{tpu_custom_call.1} parent=1 // pred_check
      _
    $region3: #{tpu_custom_call.1} parent=1 // pred_check_branch
      %14 = sbr.rel (0) target = $region5
    $region4: #{tpu_custom_call.1} parent=1 // pred_region
      %s16 = ssub.s32 128, 32
      %17 = vsyncadd [#allocation4], %s16
      %s18 = sshll.u32 [#allocation3], 4
      %s19 = int_to_ptr.vmem [resolvable:$true] %s18
      %24 = dma.hbm_to_vmem [thread:$0]  %s0, 32, %s19, [#allocation4], 32, 32, 2
    $region5: #{tpu_custom_call.1} parent=1 // pred_fallthru
      _
    // Predicated region
    $region6: #{tpu_custom_call.1} parent=1 // pred_check
      _
    $region7: #{tpu_custom_call.1} parent=1 // pred_check_branch
      %26 = sbr.rel (0) target = $region9
    $region8: #{tpu_custom_call.1} parent=1 // pred_region
      %s28 = ssub.s32 256, 256
      %29 = vsyncadd [#allocation7], %s28
      %s30 = sshll.u32 [#allocation6], 4
      %s31 = int_to_ptr.vmem [resolvable:$true] %s30
      %36 = dma.hbm_to_vmem [thread:$0]  %s1, 256, %s31, [#allocation7], 64, 64, 4
    $region9: #{tpu_custom_call.1} parent=1 // pred_fallthru
      _
    // Predicated region
    $region10: #{tpu_custom_call.1} parent=1 // pred_check
      _
    $region11: #{tpu_custom_call.1} parent=1 // pred_check_branch
      %38 = sbr.rel (0) target = $region13
    $region12: #{tpu_custom_call.1} parent=1 // pred_region
      _
    $region13: #{tpu_custom_call.1} parent=1 // pred_fallthru
      _
    // Predicated region
    $region14: #{tpu_custom_call.1} parent=1 // pred_check
      _
    $region15: #{tpu_custom_call.1} parent=1 // pred_check_branch
      %40 = sbr.rel (0) target = $region17
    $region16: #{tpu_custom_call.1} parent=1 // pred_region
      %s42 = ssub.s32 2048, 2048
      %43 = vsyncadd [#allocation7], %s42
      %s44 = sshll.u32 [#allocation8], 4
      %s45 = int_to_ptr.vmem [resolvable:$true] %s44
      %50 = dma.hbm_to_vmem [thread:$0]  %s3, 2048, %s45, [#allocation7], 128, 128, 8
    $region17: #{tpu_custom_call.1} parent=1 // pred_fallthru
      _
    // Predicated region
    $region18: #{tpu_custom_call.1} parent=1 // pred_check
      _
    $region19: #{tpu_custom_call.1} parent=1 // pred_check_branch
      %52 = sbr.rel (0) target = $region21
    $region20: #{tpu_custom_call.1} parent=1 // pred_region
      _
    $region21: #{tpu_custom_call.1} parent=1 // pred_fallthru
      _
    // Predicated region
    $region22: #{tpu_custom_call.1} parent=1 // pred_check
      _
    $region23: #{tpu_custom_call.1} parent=1 // pred_check_branch
      %54 = sbr.rel (0) target = $region25
    $region24: #{tpu_custom_call.1} parent=1 // pred_region
      %55 = dma.done [#allocation4], 128
    $region25: #{tpu_custom_call.1} parent=1 // pred_fallthru
      _
    // Predicated region
    $region26: #{tpu_custom_call.1} parent=1 // pred_check
      _
    $region27: #{tpu_custom_call.1} parent=1 // pred_check_branch
      %57 = sbr.rel (0) target = $region29
    $region28: #{tpu_custom_call.1} parent=1 // pred_region
      %58 = dma.done [#allocation7], 256
    $region29: #{tpu_custom_call.1} parent=1 // pred_fallthru
      _
    // Predicated region
    $region30: #{tpu_custom_call.1} parent=1 // pred_check
      _
    $region31: #{tpu_custom_call.1} parent=1 // pred_check_branch
      %60 = sbr.rel (0) target = $region33
    $region32: #{tpu_custom_call.1} parent=1 // pred_region
      %61 = dma.done [#allocation7], 2048
    $region33: #{tpu_custom_call.1} parent=1 // pred_fallthru
      _
    %p63 = scmp.eq.s32.totalorder 0, 0
    // Predicated region
    $region34: #{tpu_custom_call.1} parent=1 // pred_check
      %p64 = pneg %p63
    $region35: #{tpu_custom_call.1} parent=1 // pred_check_branch
      %66 = sbr.rel (%p64) target = $region37
    $region36: #{tpu_custom_call.1} parent=1 // pred_region
      %v67 = vld [vmem:[#allocation3] sm:$0xff]
      %v68 = vpack.c.bf16 %v67, %v67
      %v69 = vld [vmem:[#allocation6] sm:$0xf]
      %v70 = vld [vmem:[#allocation6 + $0x4] sm:$0xf]
      %v71 = vld [vmem:[#allocation6 + $0x8] sm:$0xf]
      %v72 = vld [vmem:[#allocation6 + $0xc] sm:$0xf]
      %v73 = vld [vmem:[%s2] sm:$0x1]
      %v75 = vlaneseq
      %v76 = vshrl.u32 %v75, 7
      %v77 = vsub.s32 0, %v76
      %v78 = vrot.slane %v73, %v77
      %v84 = vunpack.c.l.b16 %v69
      %v85 = vunpack.c.l.b16 %v70
      %v86 = vunpack.c.l.b16 %v71
      %v87 = vunpack.c.l.b16 %v72
      %v88 = vpack.c.b16 %v85, %v84
      %v89 = vpack.c.b16 %v87, %v86
      %vm92 = vcmask 261120
      %v94 = vsel %vm92, %v68, 0
      %96 = vmatprep.subr.bf16.mxu0 0
      %97 = vmatpush1.bf16.msra.mxu0 %v88
      %98 = vmatprep.subr.bf16.mxu0 0
      %99 = vmatpush1.bf16.msra.mxu0 %v89
      %100 = vmatprep.subr.bf16.mxu0 0
      %101 = vmatpush1.bf16.msra.mxu0 0
      %102 = vmatprep.subr.bf16.mxu0 0
      %103 = vmatpush1.bf16.msra.mxu0 0
      %104 = vmatprep.subr.bf16.mxu0 0
      %105 = vmatpush1.bf16.msra.mxu0 0
      %106 = vmatprep.subr.bf16.mxu0 0
      %107 = vmatpush1.bf16.msra.mxu0 0
      %108 = vmatprep.subr.bf16.mxu0 0
      %109 = vmatpush1.bf16.msra.mxu0 0
      %110 = vmatprep.subr.bf16.mxu0 0
      %111 = vmatpush1.bf16.msra.mxu0 0
      %112 = vmatprep.subr.bf16.mxu0 0
      %113 = vmatpush1.bf16.msra.mxu0 0
      %114 = vmatprep.subr.bf16.mxu0 0
      %115 = vmatpush1.bf16.msra.mxu0 0
      %116 = vmatprep.subr.bf16.mxu0 0
      %117 = vmatpush1.bf16.msra.mxu0 0
      %118 = vmatprep.subr.bf16.mxu0 0
      %119 = vmatpush1.bf16.msra.mxu0 0
      %120 = vmatprep.subr.bf16.mxu0 0
      %121 = vmatpush1.bf16.msra.mxu0 0
      %122 = vmatprep.subr.bf16.mxu0 0
      %123 = vmatpush1.bf16.msra.mxu0 0
      %124 = vmatprep.subr.bf16.mxu0 0
      %125 = vmatpush1.bf16.msra.mxu0 0
      %126 = vmatprep.subr.bf16.mxu0 0
      %127 = vmatpush1.bf16.msra.mxu0 0
      %128 = vmatprep.mubr.bf16.mxu0 0
      %129 = vmatmul.mubr.bf16.gmra.mrb[0].mxu0 %v94
      %v130 = vpop.f32.mrb[0].mxu0
      %v131 = vadd.f32 %v78, %v130
      %v132 = vpop.f32.mrb[0].mxu0
      %v133 = vpop.f32.mrb[0].mxu0
      %v134 = vpop.f32.mrb[0].mxu0
      %135 = vdwg.mxu0
      %v136 = vtanh.pop %v131
      %v137 = vpack.c.bf16 %v136, %v136
      %138 = vst [vmem:[#allocation2] sm:$0xf] %v137
    $region37: #{tpu_custom_call.1} parent=1 // pred_fallthru
      _
    %v139 = vld [vmem:[#allocation2] sm:$0xf]
    %v140 = vld [vmem:[#allocation8] sm:$0xff]
    %v141 = vld [vmem:[#allocation8 + $0x8] sm:$0xff]
    %v142 = vld [vmem:[#allocation8 + $0x10] sm:$0xff]
    %v143 = vld [vmem:[#allocation8 + $0x18] sm:$0xff]
    %v144 = vld [vmem:[#allocation8 + $0x20] sm:$0xff]
    %v145 = vld [vmem:[#allocation8 + $0x28] sm:$0xff]
    %v146 = vld [vmem:[#allocation8 + $0x30] sm:$0xff]
    %v147 = vld [vmem:[#allocation8 + $0x38] sm:$0xff]
    %v148 = vld [vmem:[#allocation8 + $0x40] sm:$0xff]
    %v149 = vld [vmem:[#allocation8 + $0x48] sm:$0xff]
    %v150 = vld [vmem:[#allocation8 + $0x50] sm:$0xff]
    %v151 = vld [vmem:[#allocation8 + $0x58] sm:$0xff]
    %v152 = vld [vmem:[#allocation8 + $0x60] sm:$0xff]
    %v153 = vld [vmem:[#allocation8 + $0x68] sm:$0xff]
    %v154 = vld [vmem:[#allocation8 + $0x70] sm:$0xff]
    %v155 = vld [vmem:[#allocation8 + $0x78] sm:$0xff]
    %v156 = vld [vmem:[%s4] sm:$0x3]
    %v158 = vlaneseq
    %v159 = vshrl.u32 %v158, 7
    %v160 = vsub.s32 0, %v159
    %v161 = vrot.slane %v156, %v160
    %v162 = vlaneseq
    %v163 = vshrl.u32 %v162, 7
    %v164 = vsub.s32 1, %v163
    %v165 = vrot.slane %v156, %v164
    %v184 = vunpack.c.l.b16 %v140
    %v185 = vunpack.c.h.b16 %v140
    %v186 = vunpack.c.l.b16 %v141
    %v187 = vunpack.c.h.b16 %v141
    %v188 = vunpack.c.l.b16 %v142
    %v189 = vunpack.c.h.b16 %v142
    %v190 = vunpack.c.l.b16 %v143
    %v191 = vunpack.c.h.b16 %v143
    %v192 = vunpack.c.l.b16 %v144
    %v193 = vunpack.c.h.b16 %v144
    %v194 = vunpack.c.l.b16 %v145
    %v195 = vunpack.c.h.b16 %v145
    %v196 = vunpack.c.l.b16 %v146
    %v197 = vunpack.c.h.b16 %v146
    %v198 = vunpack.c.l.b16 %v147
    %v199 = vunpack.c.h.b16 %v147
    %v200 = vunpack.c.l.b16 %v148
    %v201 = vunpack.c.h.b16 %v148
    %v202 = vunpack.c.l.b16 %v149
    %v203 = vunpack.c.h.b16 %v149
    %v204 = vunpack.c.l.b16 %v150
    %v205 = vunpack.c.h.b16 %v150
    %v206 = vunpack.c.l.b16 %v151
    %v207 = vunpack.c.h.b16 %v151
    %v208 = vunpack.c.l.b16 %v152
    %v209 = vunpack.c.h.b16 %v152
    %v210 = vunpack.c.l.b16 %v153
    %v211 = vunpack.c.h.b16 %v153
    %v212 = vunpack.c.l.b16 %v154
    %v213 = vunpack.c.h.b16 %v154
    %v214 = vunpack.c.l.b16 %v155
    %v215 = vunpack.c.h.b16 %v155
    %v216 = vpack.c.b16 %v186, %v184
    %v217 = vpack.c.b16 %v187, %v185
    %v218 = vpack.c.b16 %v190, %v188
    %v219 = vpack.c.b16 %v191, %v189
    %v220 = vpack.c.b16 %v194, %v192
    %v221 = vpack.c.b16 %v195, %v193
    %v222 = vpack.c.b16 %v198, %v196
    %v223 = vpack.c.b16 %v199, %v197
    %v224 = vpack.c.b16 %v202, %v200
    %v225 = vpack.c.b16 %v203, %v201
    %v226 = vpack.c.b16 %v206, %v204
    %v227 = vpack.c.b16 %v207, %v205
    %v228 = vpack.c.b16 %v210, %v208
    %v229 = vpack.c.b16 %v211, %v209
    %v230 = vpack.c.b16 %v214, %v212
    %v231 = vpack.c.b16 %v215, %v213
    %248 = vmatprep.subr.bf16.mxu0 %v217
    %249 = vmatpush1.bf16.msra.mxu0 %v216
    %250 = vmatprep.subr.bf16.mxu0 %v219
    %251 = vmatpush1.bf16.msra.mxu0 %v218
    %252 = vmatprep.subr.bf16.mxu0 %v221
    %253 = vmatpush1.bf16.msra.mxu0 %v220
    %254 = vmatprep.subr.bf16.mxu0 %v223
    %255 = vmatpush1.bf16.msra.mxu0 %v222
    %256 = vmatprep.subr.bf16.mxu0 %v225
    %257 = vmatpush1.bf16.msra.mxu0 %v224
    %258 = vmatprep.subr.bf16.mxu0 %v227
    %259 = vmatpush1.bf16.msra.mxu0 %v226
    %260 = vmatprep.subr.bf16.mxu0 %v229
    %261 = vmatpush1.bf16.msra.mxu0 %v228
    %262 = vmatprep.subr.bf16.mxu0 %v231
    %263 = vmatpush1.bf16.msra.mxu0 %v230
    %264 = vmatprep.subr.bf16.mxu0 0
    %265 = vmatpush1.bf16.msra.mxu0 0
    %266 = vmatprep.subr.bf16.mxu0 0
    %267 = vmatpush1.bf16.msra.mxu0 0
    %268 = vmatprep.subr.bf16.mxu0 0
    %269 = vmatpush1.bf16.msra.mxu0 0
    %270 = vmatprep.subr.bf16.mxu0 0
    %271 = vmatpush1.bf16.msra.mxu0 0
    %272 = vmatprep.subr.bf16.mxu0 0
    %273 = vmatpush1.bf16.msra.mxu0 0
    %274 = vmatprep.subr.bf16.mxu0 0
    %275 = vmatpush1.bf16.msra.mxu0 0
    %276 = vmatprep.subr.bf16.mxu0 0
    %277 = vmatpush1.bf16.msra.mxu0 0
    %278 = vmatprep.subr.bf16.mxu0 0
    %279 = vmatpush1.bf16.msra.mxu0 0
    %280 = vmatprep.mubr.bf16.mxu0 0
    %281 = vmatmul.mubr.bf16.gmra.mrb[0].mxu0 %v139
    %v282 = vpop.f32.mrb[0].mxu0
    %v283 = vadd.f32 %v161, %v282
    %v284 = vpop.f32.mrb[0].mxu0
    %v285 = vadd.f32 %v165, %v284
    %v286 = vpop.f32.mrb[0].mxu0
    %v287 = vpop.f32.mrb[0].mxu0
    %288 = vdwg.mxu0
    %v291 = vcombine.low %v283, %v285
    %v292 = vcombine.high %v283, %v285
    %v294 = vunpack.c.l.s4 1983009808
    %v295 = vunpack.c.0.s8 %v294
    %v296 = vlaneseq
    %v297 = vshrl.u32 %v296, 7
    %v298 = vsub.s32 %v295, %v297
    %v299 = vrot.slane %v291, %v298
    %v301 = vunpack.c.l.s4 1983009808
    %v302 = vunpack.c.0.s8 %v301
    %v303 = vlaneseq
    %v304 = vshrl.u32 %v303, 7
    %v305 = vsub.s32 %v302, %v304
    %v306 = vrot.slane %v292, %v305
    %v307 = vcombine.high %v299, %v299
    %v308 = vcombine.high %v306, %v306
    %313 = vst [vmem:[#allocation9] sm:$0xf] %v299
    %314 = vst [vmem:[#allocation9 + $0x4] sm:$0xf] %v307
    %315 = vst [vmem:[#allocation9 + $0x8] sm:$0xf] %v306
    %316 = vst [vmem:[#allocation9 + $0xc] sm:$0xf] %v308
    // Predicated region
    $region38: #{tpu_custom_call.1} parent=1 // pred_check
      _
    $region39: #{tpu_custom_call.1} parent=1 // pred_check_branch
      %318 = sbr.rel (0) target = $region41
    $region40: #{tpu_custom_call.1} parent=1 // pred_region
      %s320 = ssub.s32 256, 64
      %321 = vsyncadd [#allocation5], %s320
      %s322 = sshll.u32 [#allocation9], 4
      %s323 = int_to_ptr.vmem [resolvable:$true] %s322
      %328 = dma.vmem_to_hbm [thread:$0]  %s323, 64, %s5, [#allocation5], 64, 64, 4
    $region41: #{tpu_custom_call.1} parent=1 // pred_fallthru
      _
    // Predicated region
    $region42: #{tpu_custom_call.1} parent=1 // pred_check
      _
    $region43: #{tpu_custom_call.1} parent=1 // pred_check_branch
      %330 = sbr.rel (0) target = $region45
    $region44: #{tpu_custom_call.1} parent=1 // pred_region
      %331 = dma.done [#allocation5], 256
    $region45: #{tpu_custom_call.1} parent=1 // pred_fallthru
      _
    %332 = vsyncpa [#allocation4], 1
    %333 = vsyncpa [#allocation7], 1
    %334 = vsyncpa [#allocation5], 1

// kernel: tpu_custom_call.1
$region0: #{tpu_custom_call.1}
  #allocation0 [shape = 'u32[]', space=smem, size = 0x4, offset = 0x4, fixed_abs, tag = 'smem constant byte address 0x4 - core index']
  #allocation1 [shape = 'u32[144,128]{1,0:T(1,128)}', space=vmem, size = 0x12000, scoped, tag = 'internal scratch']
  #allocation2 [shape = 'bf16[8,128]{1,0:T(8,128)(2,1)}', space=vmem, size = 0x800, scoped, tag = 'scratch operand']
  %s0 = inlined_call_operand.hbm [shape: f32[2,32], index: 0, kind: input, shape index: {}]
  %s1 = inlined_call_operand.hbm [shape: bf16[32,128], index: 1, kind: input, shape index: {}]
  %s2 = inlined_call_operand.vmem [shape: f32[1,128], index: 2, kind: input, shape index: {}]
  %s3 = inlined_call_operand.hbm [shape: bf16[128,256], index: 3, kind: input, shape index: {}]
  %s4 = inlined_call_operand.vmem [shape: f32[1,256], index: 4, kind: input, shape index: {}]
  %s5 = inlined_call_operand.hbm [shape: f32[2,256], index: 5, kind: output, shape index: {}]
  %s6 = sld [smem:[#allocation0]]
  $region46: #{tpu_custom_call.1} parent=0
    _
  %s8 = ssub.s32 1, %s6
  %s9 = scalar_select 0, %s8, %s6
  $region1: #{tpu_custom_call.1} parent=0
    #allocation3 [shape = 'u8[4096]{0}', space=vmem, size = 0x1000, scoped, tag = 'input window, operand 0, single buffered']
    #allocation4 [shape = 's32[1]{0}', space=sflag, size = 0x4, scoped, tag = 'scoped memory for tpu_custom_call.1']
    #allocation5 [shape = 's32[1]{0}', space=sflag, size = 0x4, scoped, tag = 'scoped memory for tpu_custom_call.1']
    #allocation6 [shape = 'u8[8192]{0}', space=vmem, size = 0x2000, scoped, tag = 'input window, operand 1, single buffered']
    #allocation7 [shape = 's32[1]{0}', space=sflag, size = 0x4, scoped, tag = 'scoped memory for tpu_custom_call.1']
    #allocation8 [shape = 'u8[65536]{0}', space=vmem, size = 0x10000, scoped, tag = 'input window, operand 3, single buffered']
    #allocation9 [shape = 'u8[8192]{0}', space=vmem, size = 0x2000, scoped, tag = 'output window, operand 0, single buffered']
    %10 = vsyncpa [#allocation4], 0
    %11 = vsyncpa [#allocation7], 0
    %12 = vsyncpa [#allocation5], 0
    // Predicated region
    $region2: #{tpu_custom_call.1} parent=1 // pred_check
      _
    $region3: #{tpu_custom_call.1} parent=1 // pred_check_branch
      %14 = sbr.rel (0) target = $region5
    $region4: #{tpu_custom_call.1} parent=1 // pred_region
      %s16 = ssub.s32 128, 32
      %17 = vsyncadd [#allocation4], %s16
      %s18 = sshll.u32 [#allocation3], 4
      %s19 = int_to_ptr.vmem [resolvable:$true] %s18
      %24 = dma.hbm_to_vmem [thread:$0]  %s0, 32, %s19, [#allocation4], 32, 32, 2
    $region5: #{tpu_custom_call.1} parent=1 // pred_fallthru
      _
    // Predicated region
    $region6: #{tpu_custom_call.1} parent=1 // pred_check
      _
    $region7: #{tpu_custom_call.1} parent=1 // pred_check_branch
      %26 = sbr.rel (0) target = $region9
    $region8: #{tpu_custom_call.1} parent=1 // pred_region
      %s28 = ssub.s32 256, 256
      %29 = vsyncadd [#allocation7], %s28
      %s30 = sshll.u32 [#allocation6], 4
      %s31 = int_to_ptr.vmem [resolvable:$true] %s30
      %36 = dma.hbm_to_vmem [thread:$0]  %s1, 256, %s31, [#allocation7], 64, 64, 4
    $region9: #{tpu_custom_call.1} parent=1 // pred_fallthru
      _
    // Predicated region
    $region10: #{tpu_custom_call.1} parent=1 // pred_check
      _
    $region11: #{tpu_custom_call.1} parent=1 // pred_check_branch
      %38 = sbr.rel (0) target = $region13
    $region12: #{tpu_custom_call.1} parent=1 // pred_region
      _
    $region13: #{tpu_custom_call.1} parent=1 // pred_fallthru
      _
    // Predicated region
    $region14: #{tpu_custom_call.1} parent=1 // pred_check
      _
    $region15: #{tpu_custom_call.1} parent=1 // pred_check_branch
      %40 = sbr.rel (0) target = $region17
    $region16: #{tpu_custom_call.1} parent=1 // pred_region
      %s42 = ssub.s32 2048, 2048
      %43 = vsyncadd [#allocation7], %s42
      %s44 = sshll.u32 [#allocation8], 4
      %s45 = int_to_ptr.vmem [resolvable:$true] %s44
      %50 = dma.hbm_to_vmem [thread:$0]  %s3, 2048, %s45, [#allocation7], 128, 128, 8
    $region17: #{tpu_custom_call.1} parent=1 // pred_fallthru
      _
    // Predicated region
    $region18: #{tpu_custom_call.1} parent=1 // pred_check
      _
    $region19: #{tpu_custom_call.1} parent=1 // pred_check_branch
      %52 = sbr.rel (0) target = $region21
    $region20: #{tpu_custom_call.1} parent=1 // pred_region
      _
    $region21: #{tpu_custom_call.1} parent=1 // pred_fallthru
      _
    // Predicated region
    $region22: #{tpu_custom_call.1} parent=1 // pred_check
      _
    $region23: #{tpu_custom_call.1} parent=1 // pred_check_branch
      %54 = sbr.rel (0) target = $region25
    $region24: #{tpu_custom_call.1} parent=1 // pred_region
      %55 = dma.done [#allocation4], 128
    $region25: #{tpu_custom_call.1} parent=1 // pred_fallthru
      _
    // Predicated region
    $region26: #{tpu_custom_call.1} parent=1 // pred_check
      _
    $region27: #{tpu_custom_call.1} parent=1 // pred_check_branch
      %57 = sbr.rel (0) target = $region29
    $region28: #{tpu_custom_call.1} parent=1 // pred_region
      %58 = dma.done [#allocation7], 256
    $region29: #{tpu_custom_call.1} parent=1 // pred_fallthru
      _
    // Predicated region
    $region30: #{tpu_custom_call.1} parent=1 // pred_check
      _
    $region31: #{tpu_custom_call.1} parent=1 // pred_check_branch
      %60 = sbr.rel (0) target = $region33
    $region32: #{tpu_custom_call.1} parent=1 // pred_region
      %61 = dma.done [#allocation7], 2048
    $region33: #{tpu_custom_call.1} parent=1 // pred_fallthru
      _
    %p63 = scmp.eq.s32.totalorder 0, 0
    // Predicated region
    $region34: #{tpu_custom_call.1} parent=1 // pred_check
      %p64 = pneg %p63
    $region35: #{tpu_custom_call.1} parent=1 // pred_check_branch
      %66 = sbr.rel (%p64) target = $region37
    $region36: #{tpu_custom_call.1} parent=1 // pred_region
      %v67 = vld [vmem:[#allocation3] sm:$0xff]
      %v68 = vpack.c.bf16 %v67, %v67
      %v69 = vld [vmem:[#allocation6] sm:$0xf]
      %v70 = vld [vmem:[#allocation6 + $0x4] sm:$0xf]
      %v71 = vld [vmem:[#allocation6 + $0x8] sm:$0xf]
      %v72 = vld [vmem:[#allocation6 + $0xc] sm:$0xf]
      %v73 = vld [vmem:[%s2] sm:$0x1]
      %v75 = vlaneseq
      %v76 = vshrl.u32 %v75, 7
      %v77 = vsub.s32 0, %v76
      %v78 = vrot.slane %v73, %v77
      %v84 = vunpack.c.l.b16 %v69
      %v85 = vunpack.c.l.b16 %v70
      %v86 = vunpack.c.l.b16 %v71
      %v87 = vunpack.c.l.b16 %v72
      %v88 = vpack.c.b16 %v85, %v84
      %v89 = vpack.c.b16 %v87, %v86
      %vm92 = vcmask 261120
      %v94 = vsel %vm92, %v68, 0
      %96 = vmatprep.subr.bf16.mxu0 0
      %97 = vmatpush1.bf16.msra.mxu0 %v88
      %98 = vmatprep.subr.bf16.mxu0 0
      %99 = vmatpush1.bf16.msra.mxu0 %v89
      %100 = vmatprep.subr.bf16.mxu0 0
      %101 = vmatpush1.bf16.msra.mxu0 0
      %102 = vmatprep.subr.bf16.mxu0 0
      %103 = vmatpush1.bf16.msra.mxu0 0
      %104 = vmatprep.subr.bf16.mxu0 0
      %105 = vmatpush1.bf16.msra.mxu0 0
      %106 = vmatprep.subr.bf16.mxu0 0
      %107 = vmatpush1.bf16.msra.mxu0 0
      %108 = vmatprep.subr.bf16.mxu0 0
      %109 = vmatpush1.bf16.msra.mxu0 0
      %110 = vmatprep.subr.bf16.mxu0 0
      %111 = vmatpush1.bf16.msra.mxu0 0
      %112 = vmatprep.subr.bf16.mxu0 0
      %113 = vmatpush1.bf16.msra.mxu0 0
      %114 = vmatprep.subr.bf16.mxu0 0
      %115 = vmatpush1.bf16.msra.mxu0 0
      %116 = vmatprep.subr.bf16.mxu0 0
      %117 = vmatpush1.bf16.msra.mxu0 0
      %118 = vmatprep.subr.bf16.mxu0 0
      %119 = vmatpush1.bf16.msra.mxu0 0
      %120 = vmatprep.subr.bf16.mxu0 0
      %121 = vmatpush1.bf16.msra.mxu0 0
      %122 = vmatprep.subr.bf16.mxu0 0
      %123 = vmatpush1.bf16.msra.mxu0 0
      %124 = vmatprep.subr.bf16.mxu0 0
      %125 = vmatpush1.bf16.msra.mxu0 0
      %126 = vmatprep.subr.bf16.mxu0 0
      %127 = vmatpush1.bf16.msra.mxu0 0
      %128 = vmatprep.mubr.bf16.mxu0 0
      %129 = vmatmul.mubr.bf16.gmra.mrb[0].mxu0 %v94
      %v130 = vpop.f32.mrb[0].mxu0
      %v131 = vadd.f32 %v78, %v130
      %v132 = vpop.f32.mrb[0].mxu0
      %v133 = vpop.f32.mrb[0].mxu0
      %v134 = vpop.f32.mrb[0].mxu0
      %135 = vdwg.mxu0
      %v136 = vtanh.pop %v131
      %v137 = vpack.c.bf16 %v136, %v136
      %138 = vst [vmem:[#allocation2] sm:$0xf] %v137
    $region37: #{tpu_custom_call.1} parent=1 // pred_fallthru
      _
    %v139 = vld [vmem:[#allocation2] sm:$0xf]
    %v140 = vld [vmem:[#allocation8] sm:$0xff]
    %v141 = vld [vmem:[#allocation8 + $0x8] sm:$0xff]
    %v142 = vld [vmem:[#allocation8 + $0x10] sm:$0xff]
    %v143 = vld [vmem:[#allocation8 + $0x18] sm:$0xff]
    %v144 = vld [vmem:[#allocation8 + $0x20] sm:$0xff]
    %v145 = vld [vmem:[#allocation8 + $0x28] sm:$0xff]
    %v146 = vld [vmem:[#allocation8 + $0x30] sm:$0xff]
    %v147 = vld [vmem:[#allocation8 + $0x38] sm:$0xff]
    %v148 = vld [vmem:[#allocation8 + $0x40] sm:$0xff]
    %v149 = vld [vmem:[#allocation8 + $0x48] sm:$0xff]
    %v150 = vld [vmem:[#allocation8 + $0x50] sm:$0xff]
    %v151 = vld [vmem:[#allocation8 + $0x58] sm:$0xff]
    %v152 = vld [vmem:[#allocation8 + $0x60] sm:$0xff]
    %v153 = vld [vmem:[#allocation8 + $0x68] sm:$0xff]
    %v154 = vld [vmem:[#allocation8 + $0x70] sm:$0xff]
    %v155 = vld [vmem:[#allocation8 + $0x78] sm:$0xff]
    %v156 = vld [vmem:[%s4] sm:$0x3]
    %v158 = vlaneseq
    %v159 = vshrl.u32 %v158, 7
    %v160 = vsub.s32 0, %v159
    %v161 = vrot.slane %v156, %v160
    %v162 = vlaneseq
    %v163 = vshrl.u32 %v162, 7
    %v164 = vsub.s32 1, %v163
    %v165 = vrot.slane %v156, %v164
    %v184 = vunpack.c.l.b16 %v140
    %v185 = vunpack.c.h.b16 %v140
    %v186 = vunpack.c.l.b16 %v141
    %v187 = vunpack.c.h.b16 %v141
    %v188 = vunpack.c.l.b16 %v142
    %v189 = vunpack.c.h.b16 %v142
    %v190 = vunpack.c.l.b16 %v143
    %v191 = vunpack.c.h.b16 %v143
    %v192 = vunpack.c.l.b16 %v144
    %v193 = vunpack.c.h.b16 %v144
    %v194 = vunpack.c.l.b16 %v145
    %v195 = vunpack.c.h.b16 %v145
    %v196 = vunpack.c.l.b16 %v146
    %v197 = vunpack.c.h.b16 %v146
    %v198 = vunpack.c.l.b16 %v147
    %v199 = vunpack.c.h.b16 %v147
    %v200 = vunpack.c.l.b16 %v148
    %v201 = vunpack.c.h.b16 %v148
    %v202 = vunpack.c.l.b16 %v149
    %v203 = vunpack.c.h.b16 %v149
    %v204 = vunpack.c.l.b16 %v150
    %v205 = vunpack.c.h.b16 %v150
    %v206 = vunpack.c.l.b16 %v151
    %v207 = vunpack.c.h.b16 %v151
    %v208 = vunpack.c.l.b16 %v152
    %v209 = vunpack.c.h.b16 %v152
    %v210 = vunpack.c.l.b16 %v153
    %v211 = vunpack.c.h.b16 %v153
    %v212 = vunpack.c.l.b16 %v154
    %v213 = vunpack.c.h.b16 %v154
    %v214 = vunpack.c.l.b16 %v155
    %v215 = vunpack.c.h.b16 %v155
    %v216 = vpack.c.b16 %v186, %v184
    %v217 = vpack.c.b16 %v187, %v185
    %v218 = vpack.c.b16 %v190, %v188
    %v219 = vpack.c.b16 %v191, %v189
    %v220 = vpack.c.b16 %v194, %v192
    %v221 = vpack.c.b16 %v195, %v193
    %v222 = vpack.c.b16 %v198, %v196
    %v223 = vpack.c.b16 %v199, %v197
    %v224 = vpack.c.b16 %v202, %v200
    %v225 = vpack.c.b16 %v203, %v201
    %v226 = vpack.c.b16 %v206, %v204
    %v227 = vpack.c.b16 %v207, %v205
    %v228 = vpack.c.b16 %v210, %v208
    %v229 = vpack.c.b16 %v211, %v209
    %v230 = vpack.c.b16 %v214, %v212
    %v231 = vpack.c.b16 %v215, %v213
    %248 = vmatprep.subr.bf16.mxu0 %v217
    %249 = vmatpush1.bf16.msra.mxu0 %v216
    %250 = vmatprep.subr.bf16.mxu0 %v219
    %251 = vmatpush1.bf16.msra.mxu0 %v218
    %252 = vmatprep.subr.bf16.mxu0 %v221
    %253 = vmatpush1.bf16.msra.mxu0 %v220
    %254 = vmatprep.subr.bf16.mxu0 %v223
    %255 = vmatpush1.bf16.msra.mxu0 %v222
    %256 = vmatprep.subr.bf16.mxu0 %v225
    %257 = vmatpush1.bf16.msra.mxu0 %v224
    %258 = vmatprep.subr.bf16.mxu0 %v227
    %259 = vmatpush1.bf16.msra.mxu0 %v226
    %260 = vmatprep.subr.bf16.mxu0 %v229
    %261 = vmatpush1.bf16.msra.mxu0 %v228
    %262 = vmatprep.subr.bf16.mxu0 %v231
    %263 = vmatpush1.bf16.msra.mxu0 %v230
    %264 = vmatprep.subr.bf16.mxu0 0
    %265 = vmatpush1.bf16.msra.mxu0 0
    %266 = vmatprep.subr.bf16.mxu0 0
    %267 = vmatpush1.bf16.msra.mxu0 0
    %268 = vmatprep.subr.bf16.mxu0 0
    %269 = vmatpush1.bf16.msra.mxu0 0
    %270 = vmatprep.subr.bf16.mxu0 0
    %271 = vmatpush1.bf16.msra.mxu0 0
    %272 = vmatprep.subr.bf16.mxu0 0
    %273 = vmatpush1.bf16.msra.mxu0 0
    %274 = vmatprep.subr.bf16.mxu0 0
    %275 = vmatpush1.bf16.msra.mxu0 0
    %276 = vmatprep.subr.bf16.mxu0 0
    %277 = vmatpush1.bf16.msra.mxu0 0
    %278 = vmatprep.subr.bf16.mxu0 0
    %279 = vmatpush1.bf16.msra.mxu0 0
    %280 = vmatprep.mubr.bf16.mxu0 0
    %281 = vmatmul.mubr.bf16.gmra.mrb[0].mxu0 %v139
    %v282 = vpop.f32.mrb[0].mxu0
    %v283 = vadd.f32 %v161, %v282
    %v284 = vpop.f32.mrb[0].mxu0
    %v285 = vadd.f32 %v165, %v284
    %v286 = vpop.f32.mrb[0].mxu0
    %v287 = vpop.f32.mrb[0].mxu0
    %288 = vdwg.mxu0
    %v291 = vcombine.low %v283, %v285
    %v292 = vcombine.high %v283, %v285
    %v294 = vunpack.c.l.s4 1983009808
    %v295 = vunpack.c.0.s8 %v294
    %v296 = vlaneseq
    %v297 = vshrl.u32 %v296, 7
    %v298 = vsub.s32 %v295, %v297
    %v299 = vrot.slane %v291, %v298
    %v301 = vunpack.c.l.s4 1983009808
    %v302 = vunpack.c.0.s8 %v301
    %v303 = vlaneseq
    %v304 = vshrl.u32 %v303, 7
    %v305 = vsub.s32 %v302, %v304
    %v306 = vrot.slane %v292, %v305
    %v307 = vcombine.high %v299, %v299
    %v308 = vcombine.high %v306, %v306
    %313 = vst [vmem:[#allocation9] sm:$0xf] %v299
    %314 = vst [vmem:[#allocation9 + $0x4] sm:$0xf] %v307
    %315 = vst [vmem:[#allocation9 + $0x8] sm:$0xf] %v306
    %316 = vst [vmem:[#allocation9 + $0xc] sm:$0xf] %v308
    // Predicated region
    $region38: #{tpu_custom_call.1} parent=1 // pred_check
      _
    $region39: #{tpu_custom_call.1} parent=1 // pred_check_branch
      %318 = sbr.rel (0) target = $region41
    $region40: #{tpu_custom_call.1} parent=1 // pred_region
      %s320 = ssub.s32 256, 64
      %321 = vsyncadd [#allocation5], %s320
      %s322 = sshll.u32 [#allocation9], 4
      %s323 = int_to_ptr.vmem [resolvable:$true] %s322
      %328 = dma.vmem_to_hbm [thread:$0]  %s323, 64, %s5, [#allocation5], 64, 64, 4
    $region41: #{tpu_custom_call.1} parent=1 // pred_fallthru
      _
    // Predicated region
    $region42: #{tpu_custom_call.1} parent=1 // pred_check
      _
    $region43: #{tpu_custom_call.1} parent=1 // pred_check_branch
      %330 = sbr.rel (0) target = $region45
    $region44: #{tpu_custom_call.1} parent=1 // pred_region
      %331 = dma.done [#allocation5], 256
    $region45: #{tpu_custom_call.1} parent=1 // pred_fallthru
      _
    %332 = vsyncpa [#allocation4], 1
    %333 = vsyncpa [#allocation7], 1
    %334 = vsyncpa [#allocation5], 1

</llo_original>
